<compile_context>
chip_gen: v7x
topology: tpu7x:2x2x1
jax: 0.10.0
libtpu: 0.0.40
codegen_flags: <defaults>
</compile_context>

<pallas_src>
import functools
import math

import numpy as np
import jax
import jax.numpy as jnp
from jax.experimental import pallas as pl
from jax.experimental.pallas import tpu as pltpu


def _round_up(x, m):
    return (x + m - 1) // m * m


# ----------------------------------------------------------------------------
# Fused kernel: variable-selection attention + clause-pair attention
# ----------------------------------------------------------------------------
def _anch_fused_kernel(
        # --- variable-selection operands ---
        kf_ref,       # (B*Vp, H) bf16  first-half literal embeddings (padded rows)
        qs_ref,       # (B, H)    bf16  aggregated clause embedding (C_aggr)
        wvk_ref,      # (H, H)    bf16  var_K weight (in, out)
        bvk_ref,      # (1, H)    f32
        wvq_ref,      # (H, H)    bf16  var_Q weight
        bvq_ref,      # (1, H)    f32
        wa_ref,       # (1, H)    f32   var_attn weight row (VPU reduce, not MXU)
        vbias_ref,    # (1, Vp)   f32   var_attn bias on real lanes, -1e30 on pad
        # --- clause-pair operands ---
        qf_ref,       # (B*Pp, H) bf16  positive-clause embeddings (padded rows)
        kp_ref,       # (B*Np, H) bf16  negative-clause embeddings (padded rows)
        wq_ref,       # (H, H)    bf16  W_Q weight with 1/sqrt(H) folded in
        bq_ref,       # (1, H)    f32   W_Q bias with 1/sqrt(H) folded in
        wk_ref,       # (H, H)    bf16  W_K weight
        bk_ref,       # (1, H)    f32
        pbias_ref,    # (Pp, Np)  f32   0 keep / -1e30 excluded-or-pad
        # --- outputs ---
        var_ls_ref,   # (B, Vp)    f32  log_softmax over variables
        pair_lp_ref,  # (B, Pp, Np) f32 log_softmax over the clause-pair grid
        var_lp_ref,   # (B, 1)     f32  max variable log-prob
        var_idx_ref,  # (B, 1)     i32  argmax variable index
        c_lp_ref,     # (B, 1)     f32  var_logp + max pair log-prob
        pair_idx_ref, # (B, 1)     i32  argmax flat index in the ORIGINAL (P,N) grid
        *, batch, n_vars_pad, n_pos_pad, n_neg_pad, n_neg):
    f32 = jnp.float32
    big = jnp.int32(2 ** 30)

    # ---- variable selection: var_attn(tanh(var_K(K) + var_Q(Q))) ----
    kt = jnp.dot(kf_ref[...], wvk_ref[...], preferred_element_type=f32) + bvk_ref[...]
    qt = jnp.dot(qs_ref[...], wvq_ref[...], preferred_element_type=f32) + bvq_ref[...]
    # Vp is a multiple of 8 -> this reshape is layout-preserving.
    h = jnp.tanh(kt.reshape(batch, n_vars_pad, -1) + qt[:, None, :])        # (B, Vp, H)
    # (H -> 1) projection as a VPU multiply + lane reduce (no 1-of-128 MXU pad)
    u = jnp.sum(h * wa_ref[...], axis=-1) + vbias_ref[...]                  # (B, Vp)
    vmax = jnp.max(u, axis=-1, keepdims=True)                               # (B, 1)
    vlse = jnp.log(jnp.sum(jnp.exp(u - vmax), axis=-1, keepdims=True))      # (B, 1)
    var_ls_ref[...] = u - vmax - vlse
    var_logp = -vlse                                   # max of the log-softmax
    var_lp_ref[...] = var_logp
    v_lane = jax.lax.broadcasted_iota(jnp.int32, u.shape, 1)
    var_idx_ref[...] = jnp.min(jnp.where(u == vmax, v_lane, big),
                               axis=-1, keepdims=True)

    # ---- clause-pair attention: (W_Q q)(W_K k)^T / sqrt(H), masked ----
    q = jnp.dot(qf_ref[...], wq_ref[...], preferred_element_type=f32) + bq_ref[...]
    k = jnp.dot(kp_ref[...], wk_ref[...], preferred_element_type=f32) + bk_ref[...]
    q3 = q.reshape(batch, n_pos_pad, -1).astype(jnp.bfloat16)
    k3 = k.reshape(batch, n_neg_pad, -1).astype(jnp.bfloat16)
    s = jnp.einsum('bph,bnh->bpn', q3, k3, preferred_element_type=f32)
    s = s + pbias_ref[...]                                                   # (B, Pp, Np)
    # log-softmax over the whole (padded) grid; pad/excluded cells sit at -1e30
    m = jnp.max(jnp.max(s, axis=2, keepdims=True), axis=1, keepdims=True)    # (B,1,1)
    e = jnp.exp(s - m)
    lse = jnp.log(jnp.sum(jnp.sum(e, axis=2, keepdims=True), axis=1, keepdims=True))
    pair_lp_ref[...] = s - m - lse
    pair_logp = (-lse).reshape(batch, 1)
    c_lp_ref[...] = pair_logp + var_logp
    # argmax as a flat index into the ORIGINAL (P, N) grid (padding never wins)
    flat_iota = (jax.lax.broadcasted_iota(jnp.int32, (n_pos_pad, n_neg_pad), 0) * n_neg
                 + jax.lax.broadcasted_iota(jnp.int32, (n_pos_pad, n_neg_pad), 1))
    cand = jnp.where(s == m, flat_iota, big)
    pair_idx_ref[...] = jnp.min(jnp.min(cand, axis=2, keepdims=True),
                                axis=1, keepdims=True).reshape(batch, 1)


def _full_spec(shape):
    nd = len(shape)
    return pl.BlockSpec(shape, lambda *_: (0,) * nd)


def anch_fused(kf, qs, wvk, bvk, wvq, bvq, wa, vbias,
               qf, kp, wq, bq, wk, bk, pbias,
               *, batch, n_vars_pad, n_pos_pad, n_neg_pad, n_neg):
    kernel = functools.partial(
        _anch_fused_kernel, batch=batch, n_vars_pad=n_vars_pad,
        n_pos_pad=n_pos_pad, n_neg_pad=n_neg_pad, n_neg=n_neg)
    operands = (kf, qs, wvk, bvk, wvq, bvq, wa, vbias,
                qf, kp, wq, bq, wk, bk, pbias)
    out_shapes = (
        jax.ShapeDtypeStruct((batch, n_vars_pad), jnp.float32),            # var log-softmax
        jax.ShapeDtypeStruct((batch, n_pos_pad, n_neg_pad), jnp.float32),  # pair log-softmax
        jax.ShapeDtypeStruct((batch, 1), jnp.float32),                     # var_logp
        jax.ShapeDtypeStruct((batch, 1), jnp.int32),                       # var_idx
        jax.ShapeDtypeStruct((batch, 1), jnp.float32),                     # C_logp
        jax.ShapeDtypeStruct((batch, 1), jnp.int32),                       # pair flat idx
    )
    return pl.pallas_call(
        kernel,
        out_shape=out_shapes,
        grid=(1,),
        in_specs=[_full_spec(x.shape) for x in operands],
        out_specs=tuple(_full_spec(s.shape) for s in out_shapes),
        compiler_params=pltpu.CompilerParams(dimension_semantics=("arbitrary",)),
    )(*operands)


# ----------------------------------------------------------------------------
# Device-side step: operand prep + fused kernel + output slicing, one dispatch
# ----------------------------------------------------------------------------
@functools.partial(jax.jit, static_argnames=("n_vars", "hidden_size", "c_aggr"))
def _anch_device(literal_emb, clause_emb, pos, neg, pbias, params,
                 *, n_vars, hidden_size, c_aggr):
    B, _, H = literal_emb.shape
    n_pos = pos.shape[0]
    n_neg = neg.shape[0]
    Vp = _round_up(n_vars, 8)
    Pp = _round_up(n_pos, 8)
    Np = _round_up(n_neg, 8)

    # bf16 matmul operands, rows padded to sublane multiples (zeros; masked later)
    K = literal_emb[:, :n_vars]                                             # (B, V, H)
    kf = jnp.pad(K, ((0, 0), (0, Vp - n_vars), (0, 0)))
    kf = kf.reshape(B * Vp, H).astype(jnp.bfloat16)
    if c_aggr == "sum":
        qs = jnp.sum(clause_emb, axis=1)
    else:
        qs = jnp.mean(clause_emb, axis=1)
    qs = qs.astype(jnp.bfloat16)

    Qc = jnp.take(clause_emb, pos, axis=1)                                  # (B, P, H)
    Kc = jnp.take(clause_emb, neg, axis=1)                                  # (B, N, H)
    qf = jnp.pad(Qc, ((0, 0), (0, Pp - n_pos), (0, 0))).reshape(B * Pp, H).astype(jnp.bfloat16)
    kp = jnp.pad(Kc, ((0, 0), (0, Np - n_neg), (0, 0))).reshape(B * Np, H).astype(jnp.bfloat16)

    # weights: bf16 for the MXU; biases / var_attn row stay f32
    wvk = params["var_K_w"].T.astype(jnp.bfloat16)
    bvk = params["var_K_b"][None, :].astype(jnp.float32)
    wvq = params["var_Q_w"].T.astype(jnp.bfloat16)
    bvq = params["var_Q_b"][None, :].astype(jnp.float32)
    wa = params["var_attn_w"].astype(jnp.float32)                           # (1, H)
    # fold the 1/sqrt(H) score scale into W_Q (weight + bias)
    scale = 1.0 / math.sqrt(hidden_size)
    wq = (params["W_Q_w"].T * scale).astype(jnp.bfloat16)
    bq = (params["W_Q_b"] * scale)[None, :].astype(jnp.float32)
    wk = params["W_K_w"].T.astype(jnp.bfloat16)
    bk = params["W_K_b"][None, :].astype(jnp.float32)

    # var-side additive bias: var_attn bias on real lanes, -1e30 on padded lanes
    vbias = jnp.where(jnp.arange(Vp) < n_vars,
                      params["var_attn_b"][0].astype(jnp.float32),
                      jnp.float32(-1e30))[None, :]

    (var_ls_pad, pair_lp_pad, var_lp, var_idx, c_lp, pair_idx) = anch_fused(
        kf, qs, wvk, bvk, wvq, bvq, wa, vbias,
        qf, kp, wq, bq, wk, bk, pbias,
        batch=B, n_vars_pad=Vp, n_pos_pad=Pp, n_neg_pad=Np, n_neg=n_neg)

    return (var_ls_pad[:, :n_vars],            # (B, V)    variable log-softmax
            pair_lp_pad[:, :n_pos, :n_neg],    # (B, P, N) clause-pair log-softmax
            var_lp[:, 0],                      # (B,)      max variable log-prob
            var_idx[:, 0],                     # (B,)      argmax variable index
            c_lp[:, 0],                        # (B,)      var_logp + pair_logp
            pair_idx[:, 0])                    # (B,)      flat argmax index in (P, N)


# ----------------------------------------------------------------------------
# Full forward (host glue)
# ----------------------------------------------------------------------------
def anch_attention_forward(state, params, piv_dict, hidden_size, c_aggr="sum"):
    literal_emb = state["literal_emb"]          # (B, 2*V, H)
    clause_emb = state["clause_emb"]            # (B, C, H)
    B, n_lits, _ = literal_emb.shape
    n_vars = n_lits // 2

    # TODO(synk): env.pivot_by_var / env.res_mask are external environment
    # lookups; piv_dict is provided deterministically by the caller here.
    pos_idx = list(piv_dict["v_pos_idx"])
    neg_idx = list(piv_dict["v_neg_idx"])
    all_idx = pos_idx + neg_idx
    P, N = len(pos_idx), len(neg_idx)
    Pp, Np = _round_up(P, 8), _round_up(N, 8)

    # additive exclusion bias (keep_mask + taken_set + padding) -- host logic
    keep = np.asarray(piv_dict["v_res_mask"], dtype=np.float32)             # (P, N)
    pbias_np = np.full((Pp, Np), -1e30, dtype=np.float32)
    pbias_np[:P, :N] = np.where(keep > 0, 0.0, -1e30)
    for p in state["taken_set"]:
        if p[0] in all_idx and p[1] in all_idx:
            p_small = [None, None]
            for i in range(2):
                if p[i] in pos_idx:
                    p_small[0] = pos_idx.index(p[i])
                else:
                    p_small[1] = neg_idx.index(p[i])
            if None in p_small:
                continue
            pbias_np[p_small[0], p_small[1]] = -1e30
    pbias = jnp.asarray(pbias_np)
    pos = jnp.asarray(pos_idx, dtype=jnp.int32)
    neg = jnp.asarray(neg_idx, dtype=jnp.int32)

    (log_score, logp_grid_exc, var_logp, var_idx_dev,
     C_logp, pair_idx_dev) = _anch_device(
        literal_emb, clause_emb, pos, neg, pbias, params,
        n_vars=n_vars, hidden_size=hidden_size, c_aggr=c_aggr)

    # TODO(synk): like the original .item() calls, selected indices come from
    # batch row 0; env bookkeeping needs Python ints, so this is the single
    # device->host sync point of the step.
    var_idx = int(var_idx_dev[0])
    flat = int(pair_idx_dev[0])
    C_idx = (pos_idx[flat // N], neg_idx[flat % N])
    state["taken_set"].add(C_idx)
    return {"c_logp": C_logp, "c_idx": [C_idx], "var_idx": var_idx,
            "var_log_score": log_score, "logp_grid": logp_grid_exc}


# ----------------------------------------------------------------------------
if __name__ == "__main__":
    B, H = 2, 32
    n_vars = 6
    n_lits = 2 * n_vars
    n_clauses = 8

    key = jax.random.PRNGKey(0)
    ks = jax.random.split(key, 12)

    state = {
        "literal_emb": jax.random.normal(ks[0], (B, n_lits, H), jnp.float32),
        "clause_emb": jax.random.normal(ks[1], (B, n_clauses, H), jnp.float32),
        "taken_set": {(0, 3)},     # host-side bookkeeping set of clause-index pairs
    }

    # Parameters (PyTorch nn.Linear convention: weight (out, in), bias (out,)).
    def lin(kw, kb, out_dim, in_dim, scale=0.1):
        return (scale * jax.random.normal(kw, (out_dim, in_dim), jnp.float32),
                scale * jax.random.normal(kb, (out_dim,), jnp.float32))

    params = {}
    params["var_K_w"], params["var_K_b"] = lin(ks[2], ks[3], H, H)
    params["var_Q_w"], params["var_Q_b"] = lin(ks[4], ks[5], H, H)
    params["var_attn_w"], params["var_attn_b"] = lin(ks[6], ks[7], 1, H)
    params["W_Q_w"], params["W_Q_b"] = lin(ks[8], ks[9], H, H)
    params["W_K_w"], params["W_K_b"] = lin(ks[10], ks[11], H, H)

    # TODO(synk): env.pivot_by_var / env.res_mask are external environment
    # lookups; synthesized deterministically here.
    piv_dict = {
        "v_pos_idx": (0, 2, 5),
        "v_neg_idx": (1, 3, 4, 6),
        "v_res_mask": jnp.array(
            [[1, 1, 0, 1],
             [1, 1, 1, 1],
             [0, 1, 1, 1]], dtype=jnp.float32),
    }

    ret = anch_attention_forward(state, params, piv_dict, hidden_size=H)
    c_logp = jax.block_until_ready(ret["c_logp"])

    assert c_logp.shape == (B,)
    assert not bool(jnp.any(jnp.isnan(c_logp)))
    # log-softmax self-consistency: probabilities sum to 1 over each domain
    var_prob_sum = jnp.sum(jnp.exp(ret["var_log_score"]), axis=-1)
    pair_prob_sum = jnp.sum(jnp.exp(ret["logp_grid"]), axis=(1, 2))
    assert bool(jnp.allclose(var_prob_sum, 1.0, atol=1e-3))
    assert bool(jnp.allclose(pair_prob_sum, 1.0, atol=1e-3))
    # in-kernel reductions agree with the returned log-prob grids
    P, N = 3, 4
    c_logp_ref = (jnp.max(ret["logp_grid"].reshape(B, -1), axis=-1)
                  + jnp.max(ret["var_log_score"], axis=-1))
    assert bool(jnp.allclose(c_logp, c_logp_ref, atol=1e-4))
    assert ret["var_idx"] == int(jnp.argmax(ret["var_log_score"][0]))
    flat_ref = int(jnp.argmax(ret["logp_grid"][0].reshape(-1)))
    assert ret["c_idx"][0] == (piv_dict["v_pos_idx"][flat_ref // N],
                               piv_dict["v_neg_idx"][flat_ref % N])
    print("KERNEL_OK")
</pallas_src>

<mosaic_0001>
module attributes {stable_mosaic.version = 11 : i64} {
  func.func @_anch_fused_kernel(%arg0: i32, %arg1: memref<16x32xbf16, #tpu.memory_space<vmem>>, %arg2: memref<2x32xbf16, #tpu.memory_space<vmem>>, %arg3: memref<32x32xbf16, #tpu.memory_space<vmem>>, %arg4: memref<1x32xf32, #tpu.memory_space<vmem>>, %arg5: memref<32x32xbf16, #tpu.memory_space<vmem>>, %arg6: memref<1x32xf32, #tpu.memory_space<vmem>>, %arg7: memref<1x32xf32, #tpu.memory_space<vmem>>, %arg8: memref<1x8xf32, #tpu.memory_space<vmem>>, %arg9: memref<16x32xbf16, #tpu.memory_space<vmem>>, %arg10: memref<16x32xbf16, #tpu.memory_space<vmem>>, %arg11: memref<32x32xbf16, #tpu.memory_space<vmem>>, %arg12: memref<1x32xf32, #tpu.memory_space<vmem>>, %arg13: memref<32x32xbf16, #tpu.memory_space<vmem>>, %arg14: memref<1x32xf32, #tpu.memory_space<vmem>>, %arg15: memref<8x8xf32, #tpu.memory_space<vmem>>, %arg16: memref<2x8xf32, #tpu.memory_space<vmem>>, %arg17: memref<2x8x8xf32, #tpu.memory_space<vmem>>, %arg18: memref<2x1xf32, #tpu.memory_space<vmem>>, %arg19: memref<2x1xi32, #tpu.memory_space<vmem>>, %arg20: memref<2x1xf32, #tpu.memory_space<vmem>>, %arg21: memref<2x1xi32, #tpu.memory_space<vmem>>) attributes {dimension_semantics = [#tpu.dimension_semantics<arbitrary>], iteration_bounds = array<i64: 1>, scalar_prefetch = 0 : i64, scratch_operands = 0 : i64, tpu.core_type = #tpu.core_type<tc>, window_params = [{pipeline_mode = #tpu.pipeline_mode<synchronous>, transform_indices = @transform_0, window_bounds = array<i64: 16, 32>}, {pipeline_mode = #tpu.pipeline_mode<synchronous>, transform_indices = @transform_1, window_bounds = array<i64: 2, 32>}, {pipeline_mode = #tpu.pipeline_mode<synchronous>, transform_indices = @transform_2, window_bounds = array<i64: 32, 32>}, {pipeline_mode = #tpu.pipeline_mode<synchronous>, transform_indices = @transform_3, window_bounds = array<i64: 1, 32>}, {pipeline_mode = #tpu.pipeline_mode<synchronous>, transform_indices = @transform_4, window_bounds = array<i64: 32, 32>}, {pipeline_mode = #tpu.pipeline_mode<synchronous>, transform_indices = @transform_5, window_bounds = array<i64: 1, 32>}, {pipeline_mode = #tpu.pipeline_mode<synchronous>, transform_indices = @transform_6, window_bounds = array<i64: 1, 32>}, {pipeline_mode = #tpu.pipeline_mode<synchronous>, transform_indices = @transform_7, window_bounds = array<i64: 1, 8>}, {pipeline_mode = #tpu.pipeline_mode<synchronous>, transform_indices = @transform_8, window_bounds = array<i64: 16, 32>}, {pipeline_mode = #tpu.pipeline_mode<synchronous>, transform_indices = @transform_9, window_bounds = array<i64: 16, 32>}, {pipeline_mode = #tpu.pipeline_mode<synchronous>, transform_indices = @transform_10, window_bounds = array<i64: 32, 32>}, {pipeline_mode = #tpu.pipeline_mode<synchronous>, transform_indices = @transform_11, window_bounds = array<i64: 1, 32>}, {pipeline_mode = #tpu.pipeline_mode<synchronous>, transform_indices = @transform_12, window_bounds = array<i64: 32, 32>}, {pipeline_mode = #tpu.pipeline_mode<synchronous>, transform_indices = @transform_13, window_bounds = array<i64: 1, 32>}, {pipeline_mode = #tpu.pipeline_mode<synchronous>, transform_indices = @transform_14, window_bounds = array<i64: 8, 8>}, {pipeline_mode = #tpu.pipeline_mode<synchronous>, transform_indices = @transform_15, window_bounds = array<i64: 2, 8>}, {pipeline_mode = #tpu.pipeline_mode<synchronous>, transform_indices = @transform_16, window_bounds = array<i64: 2, 8, 8>}, {pipeline_mode = #tpu.pipeline_mode<synchronous>, transform_indices = @transform_17, window_bounds = array<i64: 2, 1>}, {pipeline_mode = #tpu.pipeline_mode<synchronous>, transform_indices = @transform_18, window_bounds = array<i64: 2, 1>}, {pipeline_mode = #tpu.pipeline_mode<synchronous>, transform_indices = @transform_19, window_bounds = array<i64: 2, 1>}, {pipeline_mode = #tpu.pipeline_mode<synchronous>, transform_indices = @transform_20, window_bounds = array<i64: 2, 1>}]} {
    %c0 = arith.constant 0 : index
    %c0_0 = arith.constant 0 : index
    %0 = vector.load %arg1[%c0, %c0_0] : memref<16x32xbf16, #tpu.memory_space<vmem>>, vector<16x32xbf16>
    %c0_1 = arith.constant 0 : index
    %c0_2 = arith.constant 0 : index
    %1 = vector.load %arg3[%c0_1, %c0_2] : memref<32x32xbf16, #tpu.memory_space<vmem>>, vector<32x32xbf16>
    %cst = arith.constant dense<0.000000e+00> : vector<16x32xf32>
    %2 = tpu.matmul %0, %1, %cst {dimension_numbers = #tpu.dot_dimension_numbers<[1], [0], [0], [1], [0, 0, 1, 1], [], []>} : vector<16x32xbf16>, vector<32x32xbf16>, vector<16x32xf32> -> vector<16x32xf32>
    %c0_3 = arith.constant 0 : index
    %c0_4 = arith.constant 0 : index
    %3 = vector.load %arg4[%c0_3, %c0_4] : memref<1x32xf32, #tpu.memory_space<vmem>>, vector<1x32xf32>
    %4 = vector.broadcast %3 : vector<1x32xf32> to vector<16x32xf32>
    %5 = arith.addf %2, %4 : vector<16x32xf32>
    %c0_5 = arith.constant 0 : index
    %c0_6 = arith.constant 0 : index
    %6 = vector.load %arg2[%c0_5, %c0_6] : memref<2x32xbf16, #tpu.memory_space<vmem>>, vector<2x32xbf16>
    %c0_7 = arith.constant 0 : index
    %c0_8 = arith.constant 0 : index
    %7 = vector.load %arg5[%c0_7, %c0_8] : memref<32x32xbf16, #tpu.memory_space<vmem>>, vector<32x32xbf16>
    %cst_9 = arith.constant dense<0.000000e+00> : vector<2x32xf32>
    %8 = tpu.matmul %6, %7, %cst_9 {dimension_numbers = #tpu.dot_dimension_numbers<[1], [0], [0], [1], [0, 0, 1, 1], [], []>} : vector<2x32xbf16>, vector<32x32xbf16>, vector<2x32xf32> -> vector<2x32xf32>
    %c0_10 = arith.constant 0 : index
    %c0_11 = arith.constant 0 : index
    %9 = vector.load %arg6[%c0_10, %c0_11] : memref<1x32xf32, #tpu.memory_space<vmem>>, vector<1x32xf32>
    %10 = vector.broadcast %9 : vector<1x32xf32> to vector<2x32xf32>
    %11 = arith.addf %8, %10 : vector<2x32xf32>
    %12 = vector.shape_cast %5 : vector<16x32xf32> to vector<2x8x32xf32>
    %13 = vector.shape_cast %11 : vector<2x32xf32> to vector<2x1x32xf32>
    %14 = vector.broadcast %13 : vector<2x1x32xf32> to vector<2x8x32xf32>
    %15 = arith.addf %12, %14 : vector<2x8x32xf32>
    %16 = math.tanh %15 : vector<2x8x32xf32>
    %c0_12 = arith.constant 0 : index
    %c0_13 = arith.constant 0 : index
    %17 = vector.load %arg7[%c0_12, %c0_13] : memref<1x32xf32, #tpu.memory_space<vmem>>, vector<1x32xf32>
    %18 = vector.shape_cast %17 : vector<1x32xf32> to vector<1x1x32xf32>
    %19 = vector.broadcast %18 : vector<1x1x32xf32> to vector<2x8x32xf32>
    %20 = arith.mulf %16, %19 : vector<2x8x32xf32>
    %cst_14 = arith.constant dense<0.000000e+00> : vector<2x8xf32>
    %21 = vector.multi_reduction <add>, %20, %cst_14 [2] : vector<2x8x32xf32> to vector<2x8xf32>
    %c0_15 = arith.constant 0 : index
    %c0_16 = arith.constant 0 : index
    %22 = vector.load %arg8[%c0_15, %c0_16] : memref<1x8xf32, #tpu.memory_space<vmem>>, vector<1x8xf32>
    %23 = vector.broadcast %22 : vector<1x8xf32> to vector<2x8xf32>
    %24 = arith.addf %21, %23 : vector<2x8xf32>
    %cst_17 = arith.constant dense<0xFF800000> : vector<2xf32>
    %25 = vector.multi_reduction <maximumf>, %24, %cst_17 [1] : vector<2x8xf32> to vector<2xf32>
    %26 = vector.shape_cast %25 : vector<2xf32> to vector<2x1xf32>
    %27 = vector.broadcast %26 : vector<2x1xf32> to vector<2x8xf32>
    %28 = arith.subf %24, %27 : vector<2x8xf32>
    %29 = math.exp %28 : vector<2x8xf32>
    %cst_18 = arith.constant dense<0.000000e+00> : vector<2xf32>
    %30 = vector.multi_reduction <add>, %29, %cst_18 [1] : vector<2x8xf32> to vector<2xf32>
    %31 = vector.shape_cast %30 : vector<2xf32> to vector<2x1xf32>
    %32 = math.log %31 : vector<2x1xf32>
    %33 = vector.broadcast %26 : vector<2x1xf32> to vector<2x8xf32>
    %34 = arith.subf %24, %33 : vector<2x8xf32>
    %35 = vector.broadcast %32 : vector<2x1xf32> to vector<2x8xf32>
    %36 = arith.subf %34, %35 : vector<2x8xf32>
    %c0_19 = arith.constant 0 : index
    %c0_20 = arith.constant 0 : index
    %37 = vector.load %arg16[%c0_19, %c0_20] : memref<2x8xf32, #tpu.memory_space<vmem>>, vector<2x8xf32>
    tpu.vector_store %arg16[%c0_19, %c0_20], %36 {strides = array<i32>} : memref<2x8xf32, #tpu.memory_space<vmem>>, vector<2x8xf32>,
    %cst_21 = arith.constant 0.000000e+00 : f32
    %38 = vector.broadcast %cst_21 : f32 to vector<2x1xf32>
    %39 = arith.subf %38, %32 : vector<2x1xf32>
    %c0_22 = arith.constant 0 : index
    %c0_23 = arith.constant 0 : index
    %40 = vector.load %arg18[%c0_22, %c0_23] : memref<2x1xf32, #tpu.memory_space<vmem>>, vector<2x1xf32>
    tpu.vector_store %arg18[%c0_22, %c0_23], %39 {strides = array<i32>} : memref<2x1xf32, #tpu.memory_space<vmem>>, vector<2x1xf32>,
    %41 = tpu.iota {dimensions = array<i32: 1>} : vector<2x8xi32>
    %42 = vector.broadcast %26 : vector<2x1xf32> to vector<2x8xf32>
    %43 = arith.cmpf oeq, %24, %42 : vector<2x8xf32>
    %c1073741824_i32 = arith.constant 1073741824 : i32
    %44 = vector.broadcast %c1073741824_i32 : i32 to vector<2x8xi32>
    %45 = arith.select %43, %41, %44 : vector<2x8xi1>, vector<2x8xi32>
    %cst_24 = arith.constant dense<2147483647> : vector<2xi32>
    %46 = vector.multi_reduction <minsi>, %45, %cst_24 [1] : vector<2x8xi32> to vector<2xi32>
    %47 = vector.shape_cast %46 : vector<2xi32> to vector<2x1xi32>
    %c0_25 = arith.constant 0 : index
    %c0_26 = arith.constant 0 : index
    %48 = vector.load %arg19[%c0_25, %c0_26] : memref<2x1xi32, #tpu.memory_space<vmem>>, vector<2x1xi32>
    tpu.vector_store %arg19[%c0_25, %c0_26], %47 {strides = array<i32>} : memref<2x1xi32, #tpu.memory_space<vmem>>, vector<2x1xi32>,
    %c0_27 = arith.constant 0 : index
    %c0_28 = arith.constant 0 : index
    %49 = vector.load %arg9[%c0_27, %c0_28] : memref<16x32xbf16, #tpu.memory_space<vmem>>, vector<16x32xbf16>
    %c0_29 = arith.constant 0 : index
    %c0_30 = arith.constant 0 : index
    %50 = vector.load %arg11[%c0_29, %c0_30] : memref<32x32xbf16, #tpu.memory_space<vmem>>, vector<32x32xbf16>
    %cst_31 = arith.constant dense<0.000000e+00> : vector<16x32xf32>
    %51 = tpu.matmul %49, %50, %cst_31 {dimension_numbers = #tpu.dot_dimension_numbers<[1], [0], [0], [1], [0, 0, 1, 1], [], []>} : vector<16x32xbf16>, vector<32x32xbf16>, vector<16x32xf32> -> vector<16x32xf32>
    %c0_32 = arith.constant 0 : index
    %c0_33 = arith.constant 0 : index
    %52 = vector.load %arg12[%c0_32, %c0_33] : memref<1x32xf32, #tpu.memory_space<vmem>>, vector<1x32xf32>
    %53 = vector.broadcast %52 : vector<1x32xf32> to vector<16x32xf32>
    %54 = arith.addf %51, %53 : vector<16x32xf32>
    %c0_34 = arith.constant 0 : index
    %c0_35 = arith.constant 0 : index
    %55 = vector.load %arg10[%c0_34, %c0_35] : memref<16x32xbf16, #tpu.memory_space<vmem>>, vector<16x32xbf16>
    %c0_36 = arith.constant 0 : index
    %c0_37 = arith.constant 0 : index
    %56 = vector.load %arg13[%c0_36, %c0_37] : memref<32x32xbf16, #tpu.memory_space<vmem>>, vector<32x32xbf16>
    %cst_38 = arith.constant dense<0.000000e+00> : vector<16x32xf32>
    %57 = tpu.matmul %55, %56, %cst_38 {dimension_numbers = #tpu.dot_dimension_numbers<[1], [0], [0], [1], [0, 0, 1, 1], [], []>} : vector<16x32xbf16>, vector<32x32xbf16>, vector<16x32xf32> -> vector<16x32xf32>
    %c0_39 = arith.constant 0 : index
    %c0_40 = arith.constant 0 : index
    %58 = vector.load %arg14[%c0_39, %c0_40] : memref<1x32xf32, #tpu.memory_space<vmem>>, vector<1x32xf32>
    %59 = vector.broadcast %58 : vector<1x32xf32> to vector<16x32xf32>
    %60 = arith.addf %57, %59 : vector<16x32xf32>
    %61 = vector.shape_cast %54 : vector<16x32xf32> to vector<2x8x32xf32>
    %62 = arith.truncf %61 : vector<2x8x32xf32> to vector<2x8x32xbf16>
    %63 = vector.shape_cast %60 : vector<16x32xf32> to vector<2x8x32xf32>
    %64 = arith.truncf %63 : vector<2x8x32xf32> to vector<2x8x32xbf16>
    "tpu.trace_start"() <{level = 10 : i32, message = "bph,bnh->bpn"}> : () -> ()
    %cst_41 = arith.constant dense<0.000000e+00> : vector<2x8x8xf32>
    %65 = tpu.matmul %62, %64, %cst_41 {dimension_numbers = #tpu.dot_dimension_numbers<[2], [2], [1], [1], [0, 0, 0, 1, 1, 1], [0], [0]>} : vector<2x8x32xbf16>, vector<2x8x32xbf16>, vector<2x8x8xf32> -> vector<2x8x8xf32>
    "tpu.trace_stop"() : () -> ()
    %c0_42 = arith.constant 0 : index
    %c0_43 = arith.constant 0 : index
    %66 = vector.load %arg15[%c0_42, %c0_43] : memref<8x8xf32, #tpu.memory_space<vmem>>, vector<8x8xf32>
    %67 = vector.shape_cast %66 : vector<8x8xf32> to vector<1x8x8xf32>
    %68 = vector.broadcast %67 : vector<1x8x8xf32> to vector<2x8x8xf32>
    %69 = arith.addf %65, %68 : vector<2x8x8xf32>
    %cst_44 = arith.constant dense<0xFF800000> : vector<2x8xf32>
    %70 = vector.multi_reduction <maximumf>, %69, %cst_44 [2] : vector<2x8x8xf32> to vector<2x8xf32>
    %71 = vector.shape_cast %70 : vector<2x8xf32> to vector<2x8x1xf32>
    %cst_45 = arith.constant dense<0xFF800000> : vector<2x1xf32>
    %72 = vector.multi_reduction <maximumf>, %71, %cst_45 [1] : vector<2x8x1xf32> to vector<2x1xf32>
    %73 = vector.shape_cast %72 : vector<2x1xf32> to vector<2x1x1xf32>
    %74 = vector.broadcast %73 : vector<2x1x1xf32> to vector<2x8x8xf32>
    %75 = arith.subf %69, %74 : vector<2x8x8xf32>
    %76 = math.exp %75 : vector<2x8x8xf32>
    %cst_46 = arith.constant dense<0.000000e+00> : vector<2x8xf32>
    %77 = vector.multi_reduction <add>, %76, %cst_46 [2] : vector<2x8x8xf32> to vector<2x8xf32>
    %78 = vector.shape_cast %77 : vector<2x8xf32> to vector<2x8x1xf32>
    %cst_47 = arith.constant dense<0.000000e+00> : vector<2x1xf32>
    %79 = vector.multi_reduction <add>, %78, %cst_47 [1] : vector<2x8x1xf32> to vector<2x1xf32>
    %80 = vector.shape_cast %79 : vector<2x1xf32> to vector<2x1x1xf32>
    %81 = math.log %80 : vector<2x1x1xf32>
    %82 = vector.broadcast %73 : vector<2x1x1xf32> to vector<2x8x8xf32>
    %83 = arith.subf %69, %82 : vector<2x8x8xf32>
    %84 = vector.broadcast %81 : vector<2x1x1xf32> to vector<2x8x8xf32>
    %85 = arith.subf %83, %84 : vector<2x8x8xf32>
    %c0_48 = arith.constant 0 : index
    %c0_49 = arith.constant 0 : index
    %c0_50 = arith.constant 0 : index
    %86 = vector.load %arg17[%c0_48, %c0_49, %c0_50] : memref<2x8x8xf32, #tpu.memory_space<vmem>>, vector<2x8x8xf32>
    tpu.vector_store %arg17[%c0_48, %c0_49, %c0_50], %85 {strides = array<i32>} : memref<2x8x8xf32, #tpu.memory_space<vmem>>, vector<2x8x8xf32>,
    %cst_51 = arith.constant 0.000000e+00 : f32
    %87 = vector.broadcast %cst_51 : f32 to vector<2x1x1xf32>
    %88 = arith.subf %87, %81 : vector<2x1x1xf32>
    %89 = vector.shape_cast %88 : vector<2x1x1xf32> to vector<2x1xf32>
    %90 = arith.addf %89, %39 : vector<2x1xf32>
    %c0_52 = arith.constant 0 : index
    %c0_53 = arith.constant 0 : index
    %91 = vector.load %arg20[%c0_52, %c0_53] : memref<2x1xf32, #tpu.memory_space<vmem>>, vector<2x1xf32>
    tpu.vector_store %arg20[%c0_52, %c0_53], %90 {strides = array<i32>} : memref<2x1xf32, #tpu.memory_space<vmem>>, vector<2x1xf32>,
    %92 = tpu.iota {dimensions = array<i32: 0>} : vector<8x8xi32>
    %c4_i32 = arith.constant 4 : i32
    %93 = vector.broadcast %c4_i32 : i32 to vector<8x8xi32>
    %94 = arith.muli %92, %93 : vector<8x8xi32>
    %95 = tpu.iota {dimensions = array<i32: 1>} : vector<8x8xi32>
    %96 = arith.addi %94, %95 : vector<8x8xi32>
    %97 = vector.broadcast %73 : vector<2x1x1xf32> to vector<2x8x8xf32>
    %98 = arith.cmpf oeq, %69, %97 : vector<2x8x8xf32>
    %c1073741824_i32_54 = arith.constant 1073741824 : i32
    %99 = vector.shape_cast %96 : vector<8x8xi32> to vector<1x8x8xi32>
    %100 = vector.broadcast %99 : vector<1x8x8xi32> to vector<2x8x8xi32>
    %101 = vector.broadcast %c1073741824_i32_54 : i32 to vector<2x8x8xi32>
    %102 = arith.select %98, %100, %101 : vector<2x8x8xi1>, vector<2x8x8xi32>
    %cst_55 = arith.constant dense<2147483647> : vector<2x8xi32>
    %103 = vector.multi_reduction <minsi>, %102, %cst_55 [2] : vector<2x8x8xi32> to vector<2x8xi32>
    %104 = vector.shape_cast %103 : vector<2x8xi32> to vector<2x8x1xi32>
    %cst_56 = arith.constant dense<2147483647> : vector<2x1xi32>
    %105 = vector.multi_reduction <minsi>, %104, %cst_56 [1] : vector<2x8x1xi32> to vector<2x1xi32>
    %106 = vector.shape_cast %105 : vector<2x1xi32> to vector<2x1x1xi32>
    %107 = vector.shape_cast %106 : vector<2x1x1xi32> to vector<2x1xi32>
    %c0_57 = arith.constant 0 : index
    %c0_58 = arith.constant 0 : index
    %108 = vector.load %arg21[%c0_57, %c0_58] : memref<2x1xi32, #tpu.memory_space<vmem>>, vector<2x1xi32>
    tpu.vector_store %arg21[%c0_57, %c0_58], %107 {strides = array<i32>} : memref<2x1xi32, #tpu.memory_space<vmem>>, vector<2x1xi32>,
    return
  }
  func.func @transform_0(%arg0: i32) -> (i32, i32) {
    %c0_i32 = arith.constant 0 : i32
    %c0_i32_0 = arith.constant 0 : i32
    %c0_i32_1 = arith.constant 0 : i32
    return %c0_i32, %c0_i32_0 : i32, i32
  }
  func.func @transform_1(%arg0: i32) -> (i32, i32) {
    %c0_i32 = arith.constant 0 : i32
    %c0_i32_0 = arith.constant 0 : i32
    %c0_i32_1 = arith.constant 0 : i32
    return %c0_i32, %c0_i32_0 : i32, i32
  }
  func.func @transform_2(%arg0: i32) -> (i32, i32) {
    %c0_i32 = arith.constant 0 : i32
    %c0_i32_0 = arith.constant 0 : i32
    %c0_i32_1 = arith.constant 0 : i32
    return %c0_i32, %c0_i32_0 : i32, i32
  }
  func.func @transform_3(%arg0: i32) -> (i32, i32) {
    %c0_i32 = arith.constant 0 : i32
    %c0_i32_0 = arith.constant 0 : i32
    %c0_i32_1 = arith.constant 0 : i32
    return %c0_i32, %c0_i32_0 : i32, i32
  }
  func.func @transform_4(%arg0: i32) -> (i32, i32) {
    %c0_i32 = arith.constant 0 : i32
    %c0_i32_0 = arith.constant 0 : i32
    %c0_i32_1 = arith.constant 0 : i32
    return %c0_i32, %c0_i32_0 : i32, i32
  }
  func.func @transform_5(%arg0: i32) -> (i32, i32) {
    %c0_i32 = arith.constant 0 : i32
    %c0_i32_0 = arith.constant 0 : i32
    %c0_i32_1 = arith.constant 0 : i32
    return %c0_i32, %c0_i32_0 : i32, i32
  }
  func.func @transform_6(%arg0: i32) -> (i32, i32) {
    %c0_i32 = arith.constant 0 : i32
    %c0_i32_0 = arith.constant 0 : i32
    %c0_i32_1 = arith.constant 0 : i32
    return %c0_i32, %c0_i32_0 : i32, i32
  }
  func.func @transform_7(%arg0: i32) -> (i32, i32) {
    %c0_i32 = arith.constant 0 : i32
    %c0_i32_0 = arith.constant 0 : i32
    %c0_i32_1 = arith.constant 0 : i32
    return %c0_i32, %c0_i32_0 : i32, i32
  }
  func.func @transform_8(%arg0: i32) -> (i32, i32) {
    %c0_i32 = arith.constant 0 : i32
    %c0_i32_0 = arith.constant 0 : i32
    %c0_i32_1 = arith.constant 0 : i32
    return %c0_i32, %c0_i32_0 : i32, i32
  }
  func.func @transform_9(%arg0: i32) -> (i32, i32) {
    %c0_i32 = arith.constant 0 : i32
    %c0_i32_0 = arith.constant 0 : i32
    %c0_i32_1 = arith.constant 0 : i32
    return %c0_i32, %c0_i32_0 : i32, i32
  }
  func.func @transform_10(%arg0: i32) -> (i32, i32) {
    %c0_i32 = arith.constant 0 : i32
    %c0_i32_0 = arith.constant 0 : i32
    %c0_i32_1 = arith.constant 0 : i32
    return %c0_i32, %c0_i32_0 : i32, i32
  }
  func.func @transform_11(%arg0: i32) -> (i32, i32) {
    %c0_i32 = arith.constant 0 : i32
    %c0_i32_0 = arith.constant 0 : i32
    %c0_i32_1 = arith.constant 0 : i32
    return %c0_i32, %c0_i32_0 : i32, i32
  }
  func.func @transform_12(%arg0: i32) -> (i32, i32) {
    %c0_i32 = arith.constant 0 : i32
    %c0_i32_0 = arith.constant 0 : i32
    %c0_i32_1 = arith.constant 0 : i32
    return %c0_i32, %c0_i32_0 : i32, i32
  }
  func.func @transform_13(%arg0: i32) -> (i32, i32) {
    %c0_i32 = arith.constant 0 : i32
    %c0_i32_0 = arith.constant 0 : i32
    %c0_i32_1 = arith.constant 0 : i32
    return %c0_i32, %c0_i32_0 : i32, i32
  }
  func.func @transform_14(%arg0: i32) -> (i32, i32) {
    %c0_i32 = arith.constant 0 : i32
    %c0_i32_0 = arith.constant 0 : i32
    %c0_i32_1 = arith.constant 0 : i32
    return %c0_i32, %c0_i32_0 : i32, i32
  }
  func.func @transform_15(%arg0: i32) -> (i32, i32) {
    %c0_i32 = arith.constant 0 : i32
    %c0_i32_0 = arith.constant 0 : i32
    %c0_i32_1 = arith.constant 0 : i32
    return %c0_i32, %c0_i32_0 : i32, i32
  }
  func.func @transform_16(%arg0: i32) -> (i32, i32, i32) {
    %c0_i32 = arith.constant 0 : i32
    %c0_i32_0 = arith.constant 0 : i32
    %c0_i32_1 = arith.constant 0 : i32
    %c0_i32_2 = arith.constant 0 : i32
    return %c0_i32, %c0_i32_0, %c0_i32_1 : i32, i32, i32
  }
  func.func @transform_17(%arg0: i32) -> (i32, i32) {
    %c0_i32 = arith.constant 0 : i32
    %c0_i32_0 = arith.constant 0 : i32
    %c0_i32_1 = arith.constant 0 : i32
    return %c0_i32, %c0_i32_0 : i32, i32
  }
  func.func @transform_18(%arg0: i32) -> (i32, i32) {
    %c0_i32 = arith.constant 0 : i32
    %c0_i32_0 = arith.constant 0 : i32
    %c0_i32_1 = arith.constant 0 : i32
    return %c0_i32, %c0_i32_0 : i32, i32
  }
  func.func @transform_19(%arg0: i32) -> (i32, i32) {
    %c0_i32 = arith.constant 0 : i32
    %c0_i32_0 = arith.constant 0 : i32
    %c0_i32_1 = arith.constant 0 : i32
    return %c0_i32, %c0_i32_0 : i32, i32
  }
  func.func @transform_20(%arg0: i32) -> (i32, i32) {
    %c0_i32 = arith.constant 0 : i32
    %c0_i32_0 = arith.constant 0 : i32
    %c0_i32_1 = arith.constant 0 : i32
    return %c0_i32, %c0_i32_0 : i32, i32
  }
}

</mosaic_0001>

<llo_original>
// kernel: _anch_device.1
$region0: #{_anch_device.1}
  #allocation0 [shape = 'u32[]', space=smem, size = 0x4, offset = 0x4, fixed_abs, tag = 'smem constant byte address 0x4 - core index']
  #allocation1 [shape = 'u32[144,128]{1,0:T(1,128)}', space=vmem, size = 0x12000, scoped, tag = 'internal scratch']
  %s0 = inlined_call_operand.vmem [shape: bf16[16,32], index: 0, kind: input, shape index: {}]
  %s1 = inlined_call_operand.vmem [shape: bf16[2,32], index: 1, kind: input, shape index: {}]
  %s2 = inlined_call_operand.vmem [shape: bf16[32,32], index: 2, kind: input, shape index: {}]
  %s3 = inlined_call_operand.vmem [shape: f32[1,32], index: 3, kind: input, shape index: {}]
  %s4 = inlined_call_operand.vmem [shape: bf16[32,32], index: 4, kind: input, shape index: {}]
  %s5 = inlined_call_operand.vmem [shape: f32[1,32], index: 5, kind: input, shape index: {}]
  %s6 = inlined_call_operand.vmem [shape: f32[1,32], index: 6, kind: input, shape index: {}]
  %s7 = inlined_call_operand.vmem [shape: f32[1,8], index: 7, kind: input, shape index: {}]
  %s8 = inlined_call_operand.vmem [shape: bf16[16,32], index: 8, kind: input, shape index: {}]
  %s9 = inlined_call_operand.vmem [shape: bf16[16,32], index: 9, kind: input, shape index: {}]
  %s10 = inlined_call_operand.vmem [shape: bf16[32,32], index: 10, kind: input, shape index: {}]
  %s11 = inlined_call_operand.vmem [shape: f32[1,32], index: 11, kind: input, shape index: {}]
  %s12 = inlined_call_operand.vmem [shape: bf16[32,32], index: 12, kind: input, shape index: {}]
  %s13 = inlined_call_operand.vmem [shape: f32[1,32], index: 13, kind: input, shape index: {}]
  %s14 = inlined_call_operand.vmem [shape: f32[8,8], index: 14, kind: input, shape index: {}]
  %s15 = inlined_call_operand.hbm [shape: f32[2,8], index: 15, kind: output, shape index: {0}]
  %s16 = inlined_call_operand.vmem [shape: f32[2,8,8], index: 16, kind: output, shape index: {1}]
  %s17 = inlined_call_operand.vmem [shape: f32[2,1], index: 17, kind: output, shape index: {2}]
  %s18 = inlined_call_operand.vmem [shape: s32[2,1], index: 18, kind: output, shape index: {3}]
  %s19 = inlined_call_operand.vmem [shape: f32[2,1], index: 19, kind: output, shape index: {4}]
  %s20 = inlined_call_operand.vmem [shape: s32[2,1], index: 20, kind: output, shape index: {5}]
  %21 = xla_tuple %s15, %s16, %s17, %s18, %s19, %s20
  %s22 = sld [smem:[#allocation0]]
  $region110: #{_anch_device.1} parent=0
    _
  %s24 = ssub.s32 1, %s22
  %s25 = scalar_select 0, %s24, %s22
  $region1: #{_anch_device.1} parent=0
    #allocation2 [shape = 'u8[1024]{0}', space=vmem, size = 0x400, scoped, tag = 'output window, operand 0, single buffered']
    #allocation3 [shape = 's32[1]{0}', space=sflag, size = 0x4, scoped, tag = 'scoped memory for _anch_device.1']
    %26 = vsyncpa [#allocation3], 0
    // Predicated region
    $region2: #{_anch_device.1} parent=1 // pred_check
      _
    $region3: #{_anch_device.1} parent=1 // pred_check_branch
      %28 = sbr.rel (0) target = $region5
    $region4: #{_anch_device.1} parent=1 // pred_region
      _
    $region5: #{_anch_device.1} parent=1 // pred_fallthru
      _
    // Predicated region
    $region6: #{_anch_device.1} parent=1 // pred_check
      _
    $region7: #{_anch_device.1} parent=1 // pred_check_branch
      %30 = sbr.rel (0) target = $region9
    $region8: #{_anch_device.1} parent=1 // pred_region
      _
    $region9: #{_anch_device.1} parent=1 // pred_fallthru
      _
    // Predicated region
    $region10: #{_anch_device.1} parent=1 // pred_check
      _
    $region11: #{_anch_device.1} parent=1 // pred_check_branch
      %32 = sbr.rel (0) target = $region13
    $region12: #{_anch_device.1} parent=1 // pred_region
      _
    $region13: #{_anch_device.1} parent=1 // pred_fallthru
      _
    // Predicated region
    $region14: #{_anch_device.1} parent=1 // pred_check
      _
    $region15: #{_anch_device.1} parent=1 // pred_check_branch
      %34 = sbr.rel (0) target = $region17
    $region16: #{_anch_device.1} parent=1 // pred_region
      _
    $region17: #{_anch_device.1} parent=1 // pred_fallthru
      _
    // Predicated region
    $region18: #{_anch_device.1} parent=1 // pred_check
      _
    $region19: #{_anch_device.1} parent=1 // pred_check_branch
      %36 = sbr.rel (0) target = $region21
    $region20: #{_anch_device.1} parent=1 // pred_region
      _
    $region21: #{_anch_device.1} parent=1 // pred_fallthru
      _
    // Predicated region
    $region22: #{_anch_device.1} parent=1 // pred_check
      _
    $region23: #{_anch_device.1} parent=1 // pred_check_branch
      %38 = sbr.rel (0) target = $region25
    $region24: #{_anch_device.1} parent=1 // pred_region
      _
    $region25: #{_anch_device.1} parent=1 // pred_fallthru
      _
    // Predicated region
    $region26: #{_anch_device.1} parent=1 // pred_check
      _
    $region27: #{_anch_device.1} parent=1 // pred_check_branch
      %40 = sbr.rel (0) target = $region29
    $region28: #{_anch_device.1} parent=1 // pred_region
      _
    $region29: #{_anch_device.1} parent=1 // pred_fallthru
      _
    // Predicated region
    $region30: #{_anch_device.1} parent=1 // pred_check
      _
    $region31: #{_anch_device.1} parent=1 // pred_check_branch
      %42 = sbr.rel (0) target = $region33
    $region32: #{_anch_device.1} parent=1 // pred_region
      _
    $region33: #{_anch_device.1} parent=1 // pred_fallthru
      _
    // Predicated region
    $region34: #{_anch_device.1} parent=1 // pred_check
      _
    $region35: #{_anch_device.1} parent=1 // pred_check_branch
      %44 = sbr.rel (0) target = $region37
    $region36: #{_anch_device.1} parent=1 // pred_region
      _
    $region37: #{_anch_device.1} parent=1 // pred_fallthru
      _
    // Predicated region
    $region38: #{_anch_device.1} parent=1 // pred_check
      _
    $region39: #{_anch_device.1} parent=1 // pred_check_branch
      %46 = sbr.rel (0) target = $region41
    $region40: #{_anch_device.1} parent=1 // pred_region
      _
    $region41: #{_anch_device.1} parent=1 // pred_fallthru
      _
    // Predicated region
    $region42: #{_anch_device.1} parent=1 // pred_check
      _
    $region43: #{_anch_device.1} parent=1 // pred_check_branch
      %48 = sbr.rel (0) target = $region45
    $region44: #{_anch_device.1} parent=1 // pred_region
      _
    $region45: #{_anch_device.1} parent=1 // pred_fallthru
      _
    // Predicated region
    $region46: #{_anch_device.1} parent=1 // pred_check
      _
    $region47: #{_anch_device.1} parent=1 // pred_check_branch
      %50 = sbr.rel (0) target = $region49
    $region48: #{_anch_device.1} parent=1 // pred_region
      _
    $region49: #{_anch_device.1} parent=1 // pred_fallthru
      _
    // Predicated region
    $region50: #{_anch_device.1} parent=1 // pred_check
      _
    $region51: #{_anch_device.1} parent=1 // pred_check_branch
      %52 = sbr.rel (0) target = $region53
    $region52: #{_anch_device.1} parent=1 // pred_region
      _
    $region53: #{_anch_device.1} parent=1 // pred_fallthru
      _
    // Predicated region
    $region54: #{_anch_device.1} parent=1 // pred_check
      _
    $region55: #{_anch_device.1} parent=1 // pred_check_branch
      %54 = sbr.rel (0) target = $region57
    $region56: #{_anch_device.1} parent=1 // pred_region
      _
    $region57: #{_anch_device.1} parent=1 // pred_fallthru
      _
    // Predicated region
    $region58: #{_anch_device.1} parent=1 // pred_check
      _
    $region59: #{_anch_device.1} parent=1 // pred_check_branch
      %56 = sbr.rel (0) target = $region61
    $region60: #{_anch_device.1} parent=1 // pred_region
      _
    $region61: #{_anch_device.1} parent=1 // pred_fallthru
      _
    %v58 = vld [vmem:[%s0] sm:$0xf]
    %v59 = vld [vmem:[%s0 + $0x4] sm:$0xf]
    %v60 = vld [vmem:[%s2] sm:$0xf]
    %v61 = vld [vmem:[%s2 + $0x4] sm:$0xf]
    %v62 = vld [vmem:[%s2 + $0x8] sm:$0xf]
    %v63 = vld [vmem:[%s2 + $0xc] sm:$0xf]
    %v64 = vld [vmem:[%s3] sm:$0x1]
    %v66 = vlaneseq
    %v67 = vshrl.u32 %v66, 7
    %v68 = vsub.s32 0, %v67
    %v69 = vrot.slane %v64, %v68
    %v73 = vunpack.c.l.b16 %v58
    %v74 = vunpack.c.l.b16 %v59
    %v75 = vpack.c.b16 %v74, %v73
    %v80 = vunpack.c.l.b16 %v60
    %v81 = vunpack.c.l.b16 %v61
    %v82 = vunpack.c.l.b16 %v62
    %v83 = vunpack.c.l.b16 %v63
    %v84 = vpack.c.b16 %v81, %v80
    %v85 = vpack.c.b16 %v83, %v82
    %vm88 = vcmask 261120
    %v90 = vsel %vm88, %v75, 0
    %92 = vmatprep.subr.bf16.mxu0 0
    %93 = vmatpush1.bf16.msra.mxu0 %v84
    %94 = vmatprep.subr.bf16.mxu0 0
    %95 = vmatpush1.bf16.msra.mxu0 %v85
    %96 = vmatprep.subr.bf16.mxu0 0
    %97 = vmatpush1.bf16.msra.mxu0 0
    %98 = vmatprep.subr.bf16.mxu0 0
    %99 = vmatpush1.bf16.msra.mxu0 0
    %100 = vmatprep.subr.bf16.mxu0 0
    %101 = vmatpush1.bf16.msra.mxu0 0
    %102 = vmatprep.subr.bf16.mxu0 0
    %103 = vmatpush1.bf16.msra.mxu0 0
    %104 = vmatprep.subr.bf16.mxu0 0
    %105 = vmatpush1.bf16.msra.mxu0 0
    %106 = vmatprep.subr.bf16.mxu0 0
    %107 = vmatpush1.bf16.msra.mxu0 0
    %108 = vmatprep.subr.bf16.mxu0 0
    %109 = vmatpush1.bf16.msra.mxu0 0
    %110 = vmatprep.subr.bf16.mxu0 0
    %111 = vmatpush1.bf16.msra.mxu0 0
    %112 = vmatprep.subr.bf16.mxu0 0
    %113 = vmatpush1.bf16.msra.mxu0 0
    %114 = vmatprep.subr.bf16.mxu0 0
    %115 = vmatpush1.bf16.msra.mxu0 0
    %116 = vmatprep.subr.bf16.mxu0 0
    %117 = vmatpush1.bf16.msra.mxu0 0
    %118 = vmatprep.subr.bf16.mxu0 0
    %119 = vmatpush1.bf16.msra.mxu0 0
    %120 = vmatprep.subr.bf16.mxu0 0
    %121 = vmatpush1.bf16.msra.mxu0 0
    %122 = vmatprep.subr.bf16.mxu0 0
    %123 = vmatpush1.bf16.msra.mxu0 0
    %124 = vmatprep.mubr.bf16.mxu0 0
    %125 = vmatmul.mubr.bf16.gmra.mrb[0].mxu0 %v90
    %v126 = vpop.f32.mrb[0].mxu0
    %v127 = vadd.f32 %v69, %v126
    %v128 = vpop.f32.mrb[0].mxu0
    %v129 = vpop.f32.mrb[0].mxu0
    %v130 = vadd.f32 %v69, %v129
    %v131 = vpop.f32.mrb[0].mxu0
    %132 = vdwg.mxu0
    %v133 = vld [vmem:[%s1] sm:$0x1]
    %v134 = vld [vmem:[%s4] sm:$0xf]
    %v135 = vld [vmem:[%s4 + $0x4] sm:$0xf]
    %v136 = vld [vmem:[%s4 + $0x8] sm:$0xf]
    %v137 = vld [vmem:[%s4 + $0xc] sm:$0xf]
    %v138 = vld [vmem:[%s5] sm:$0x1]
    %v140 = vlaneseq
    %v141 = vshrl.u32 %v140, 7
    %v142 = vsub.s32 0, %v141
    %v143 = vrot.slane %v138, %v142
    %v149 = vunpack.c.l.b16 %v134
    %v150 = vunpack.c.l.b16 %v135
    %v151 = vunpack.c.l.b16 %v136
    %v152 = vunpack.c.l.b16 %v137
    %v153 = vpack.c.b16 %v150, %v149
    %v154 = vpack.c.b16 %v152, %v151
    %v158 = vsel %vm88, %v133, 0
    %160 = vmatprep.subr.bf16.mxu0 0
    %161 = vmatpush1.bf16.msra.mxu0 %v153
    %162 = vmatprep.subr.bf16.mxu0 0
    %163 = vmatpush1.bf16.msra.mxu0 %v154
    %164 = vmatprep.subr.bf16.mxu0 0
    %165 = vmatpush1.bf16.msra.mxu0 0
    %166 = vmatprep.subr.bf16.mxu0 0
    %167 = vmatpush1.bf16.msra.mxu0 0
    %168 = vmatprep.subr.bf16.mxu0 0
    %169 = vmatpush1.bf16.msra.mxu0 0
    %170 = vmatprep.subr.bf16.mxu0 0
    %171 = vmatpush1.bf16.msra.mxu0 0
    %172 = vmatprep.subr.bf16.mxu0 0
    %173 = vmatpush1.bf16.msra.mxu0 0
    %174 = vmatprep.subr.bf16.mxu0 0
    %175 = vmatpush1.bf16.msra.mxu0 0
    %176 = vmatprep.subr.bf16.mxu0 0
    %177 = vmatpush1.bf16.msra.mxu0 0
    %178 = vmatprep.subr.bf16.mxu0 0
    %179 = vmatpush1.bf16.msra.mxu0 0
    %180 = vmatprep.subr.bf16.mxu0 0
    %181 = vmatpush1.bf16.msra.mxu0 0
    %182 = vmatprep.subr.bf16.mxu0 0
    %183 = vmatpush1.bf16.msra.mxu0 0
    %184 = vmatprep.subr.bf16.mxu0 0
    %185 = vmatpush1.bf16.msra.mxu0 0
    %186 = vmatprep.subr.bf16.mxu0 0
    %187 = vmatpush1.bf16.msra.mxu0 0
    %188 = vmatprep.subr.bf16.mxu0 0
    %189 = vmatpush1.bf16.msra.mxu0 0
    %190 = vmatprep.subr.bf16.mxu0 0
    %191 = vmatpush1.bf16.msra.mxu0 0
    %192 = vmatprep.mubr.bf16.mxu0 0
    %193 = vmatmul.mubr.bf16.gmra.mrb[0].mxu0 %v158
    %v194 = vpop.f32.mrb[0].mxu0
    %v195 = vadd.f32 %v143, %v194
    %v196 = vpop.f32.mrb[0].mxu0
    %v197 = vpop.f32.mrb[0].mxu0
    %v198 = vpop.f32.mrb[0].mxu0
    %199 = vdwg.mxu0
    %v202 = vunpack.c.l.s4 1966171168
    %v203 = vunpack.c.0.s8 %v202
    %v204 = vlaneseq
    %v205 = vshrl.u32 %v204, 7
    %v206 = vsub.s32 %v203, %v205
    %v207 = vrot.slane %v195, %v206
    %v208 = vcombine.high %v207, %v207
    %v210 = vunpack.c.l.s4 1966171168
    %v211 = vunpack.c.0.s8 %v210
    %v212 = vlaneseq
    %v213 = vshrl.u32 %v212, 7
    %v214 = vsub.s32 %v211, %v213
    %v215 = vrot.slane %v207, %v214
    %v217 = vunpack.c.l.s4 1966171168
    %v218 = vunpack.c.0.s8 %v217
    %v219 = vlaneseq
    %v220 = vshrl.u32 %v219, 7
    %v221 = vsub.s32 %v218, %v220
    %v222 = vrot.slane %v208, %v221
    %v223 = vlaneseq
    %v224 = vshrl.u32 %v223, 7
    %v225 = vsub.s32 0, %v224
    %v226 = vrot.slane %v215, %v225
    %v227 = vlaneseq
    %v228 = vshrl.u32 %v227, 7
    %v229 = vsub.s32 0, %v228
    %v230 = vrot.slane %v222, %v229
    %v233 = vadd.f32 %v127, %v226
    %v234 = vadd.f32 %v130, %v230
    %v235 = vtanh.pop %v233
    %v236 = vtanh.pop %v234
    %v237 = vld [vmem:[%s6] sm:$0x1]
    %v239 = vlaneseq
    %v240 = vshrl.u32 %v239, 7
    %v241 = vsub.s32 0, %v240
    %v242 = vrot.slane %v237, %v241
    %v244 = vmul.f32 %v235, %v242
    %v245 = vmul.f32 %v236, %v242
    %v246 = vsel %vm88, %v244, 0.0
    %247 = vadd.xlane.f32.xlu0 %v246
    %v248 = vpop.xlane.xlu0 %247
    %v249 = vsel %vm88, %v245, 0.0
    %250 = vadd.xlane.f32.xlu0 %v249
    %v251 = vpop.xlane.xlu0 %250
    %v252 = vld [vmem:[%s7] sm:$0x1]
    %v254 = vlaneseq
    %v255 = vshrl.u32 %v254, 7
    %v256 = vsub.s32 0, %v255
    %v257 = vrot.slane %v252, %v256
    %259 = vbcast.lane.b32.xlu0 %v257, 256
    %v260 = vpop.permute.xlu0 %259
    %v262 = vadd.f32 %v248, %v260
    %v263 = vadd.f32 %v251, %v260
    %266 = vset.pattern.permute.xlu0 0
    %267 = vperm.xlu0 %266, %v262
    %v268 = vpop.permute.xlu0 %267
    %269 = vset.pattern.permute.xlu0 0
    %270 = vperm.xlu0 %269, %v263
    %v271 = vpop.permute.xlu0 %270
    %v272 = vlaneseq
    %v273 = vand.u32 %v272, 127
    %v274 = vlaneseq
    %v275 = vshrl.u32 %v274, 7
    %v276 = vsub.s32 %v273, %v275
    %v277 = vrot.slane %v268, %v276
    %v278 = vlaneseq
    %v279 = vshrl.u32 %v278, 7
    %v280 = vsub.s32 %v273, %v279
    %v281 = vrot.slane %v271, %v280
    %vm282 = vcmask 1041409
    %v283 = vsel %vm282, %v281, %v277
    %vm285 = vcmask 58368
    %v286 = vsel %vm285, %v283, -inf
    %287 = vmax.xlane.f32.xlu0 %v286
    %v288 = vpop.xlane.xlu0 %287
    %v290 = vlaneseq
    %v291 = vshrl.u32 %v290, 7
    %v292 = vsub.s32 0, %v291
    %v293 = vrot.slane %v288, %v292
    %v294 = vlaneseq
    %v295 = vshrl.u32 %v294, 7
    %v296 = vsub.s32 1, %v295
    %v297 = vrot.slane %v288, %v296
    %v300 = vsub.f32 %v262, %v293
    %v301 = vsub.f32 %v263, %v297
    %v302 = vmul.f32 %v300, 1.442695
    %v303 = vpow.pop %v302
    %v304 = vmul.f32 %v301, 1.442695
    %v305 = vpow.pop %v304
    %308 = vset.pattern.permute.xlu0 0
    %309 = vperm.xlu0 %308, %v303
    %v310 = vpop.permute.xlu0 %309
    %311 = vset.pattern.permute.xlu0 0
    %312 = vperm.xlu0 %311, %v305
    %v313 = vpop.permute.xlu0 %312
    %v314 = vlaneseq
    %v315 = vshrl.u32 %v314, 7
    %v316 = vsub.s32 %v273, %v315
    %v317 = vrot.slane %v310, %v316
    %v318 = vlaneseq
    %v319 = vshrl.u32 %v318, 7
    %v320 = vsub.s32 %v273, %v319
    %v321 = vrot.slane %v313, %v320
    %v322 = vsel %vm282, %v321, %v317
    %v324 = vsel %vm285, %v322, 0.0
    %325 = vadd.xlane.f32.xlu0 %v324
    %v326 = vpop.xlane.xlu0 %325
    %v327 = vlog2.pop %v326
    %v328 = vmul.f32 %v327, 0.6931472
    %v330 = vlaneseq
    %v331 = vshrl.u32 %v330, 7
    %v332 = vsub.s32 0, %v331
    %v333 = vrot.slane %v328, %v332
    %v334 = vlaneseq
    %v335 = vshrl.u32 %v334, 7
    %v336 = vsub.s32 1, %v335
    %v337 = vrot.slane %v328, %v336
    %v340 = vsub.f32 %v300, %v333
    %v341 = vsub.f32 %v301, %v337
    %344 = vset.pattern.permute.xlu0 0
    %345 = vperm.xlu0 %344, %v340
    %v346 = vpop.permute.xlu0 %345
    %347 = vset.pattern.permute.xlu0 0
    %348 = vperm.xlu0 %347, %v341
    %v349 = vpop.permute.xlu0 %348
    %v350 = vlaneseq
    %v351 = vshrl.u32 %v350, 7
    %v352 = vsub.s32 %v273, %v351
    %v353 = vrot.slane %v346, %v352
    %v354 = vlaneseq
    %v355 = vshrl.u32 %v354, 7
    %v356 = vsub.s32 %v273, %v355
    %v357 = vrot.slane %v349, %v356
    %v358 = vsel %vm282, %v357, %v353
    %360 = vst.msk [vmem:[#allocation2] sm:$0x3] %vm285, %v358
    %v361 = vsub.f32 0.0, %v328
    %vm362 = vcmask 1024
    %363 = vst.msk [vmem:[%s17] sm:$0x3] %vm362, %v361
    %vm364 = vcmp.eq.f32.partialorder %v262, %v293
    %vm365 = vcmp.eq.f32.partialorder %v263, %v297
    %367 = vbcast.lane.b32.xlu0 %v273, 256
    %v368 = vpop.permute.xlu0 %367
    %v369 = vsel %vm364, %v368, 1073741824
    %v370 = vsel %vm365, %v368, 1073741824
    %371 = vset.pattern.permute.xlu0 0
    %372 = vperm.xlu0 %371, %v369
    %v373 = vpop.permute.xlu0 %372
    %374 = vset.pattern.permute.xlu0 0
    %375 = vperm.xlu0 %374, %v370
    %v376 = vpop.permute.xlu0 %375
    %v377 = vlaneseq
    %v378 = vshrl.u32 %v377, 7
    %v379 = vsub.s32 %v273, %v378
    %v380 = vrot.slane %v373, %v379
    %v381 = vlaneseq
    %v382 = vshrl.u32 %v381, 7
    %v383 = vsub.s32 %v273, %v382
    %v384 = vrot.slane %v376, %v383
    %v385 = vsel %vm282, %v384, %v380
    %v386 = vsel %vm285, %v385, 2147483647
    %v387 = vand.u32 %v386, 65535
    %v388 = vshra.s32 %v386, 16
    %v389 = vcvt.s32.f32 %v387
    %v390 = vcvt.s32.f32 %v388
    %391 = vmin.xlane.f32.xlu0 %v390
    %v392 = vpop.xlane.xlu0 %391
    %vm393 = vcmp.eq.f32.partialorder %v390, %v392
    %v394 = vsel %vm393, %v389, inf
    %395 = vmin.xlane.f32.xlu0 %v394
    %v396 = vpop.xlane.xlu0 %395
    %v397 = vcvt.f32.s32 %v396
    %v398 = vcvt.f32.s32 %v392
    %v399 = vshll.u32 %v398, 16
    %v400 = vadd.s32 %v399, %v397
    %401 = vst.msk [vmem:[%s18] sm:$0x3] %vm362, %v400
    %v402 = vld [vmem:[%s8] sm:$0xf]
    %v403 = vld [vmem:[%s8 + $0x4] sm:$0xf]
    %v404 = vld [vmem:[%s10] sm:$0xf]
    %v405 = vld [vmem:[%s10 + $0x4] sm:$0xf]
    %v406 = vld [vmem:[%s10 + $0x8] sm:$0xf]
    %v407 = vld [vmem:[%s10 + $0xc] sm:$0xf]
    %v408 = vld [vmem:[%s11] sm:$0x1]
    %v410 = vlaneseq
    %v411 = vshrl.u32 %v410, 7
    %v412 = vsub.s32 0, %v411
    %v413 = vrot.slane %v408, %v412
    %v417 = vunpack.c.l.b16 %v402
    %v418 = vunpack.c.l.b16 %v403
    %v419 = vpack.c.b16 %v418, %v417
    %v424 = vunpack.c.l.b16 %v404
    %v425 = vunpack.c.l.b16 %v405
    %v426 = vunpack.c.l.b16 %v406
    %v427 = vunpack.c.l.b16 %v407
    %v428 = vpack.c.b16 %v425, %v424
    %v429 = vpack.c.b16 %v427, %v426
    %v433 = vsel %vm88, %v419, 0
    %435 = vmatprep.subr.bf16.mxu0 0
    %436 = vmatpush1.bf16.msra.mxu0 %v428
    %437 = vmatprep.subr.bf16.mxu0 0
    %438 = vmatpush1.bf16.msra.mxu0 %v429
    %439 = vmatprep.subr.bf16.mxu0 0
    %440 = vmatpush1.bf16.msra.mxu0 0
    %441 = vmatprep.subr.bf16.mxu0 0
    %442 = vmatpush1.bf16.msra.mxu0 0
    %443 = vmatprep.subr.bf16.mxu0 0
    %444 = vmatpush1.bf16.msra.mxu0 0
    %445 = vmatprep.subr.bf16.mxu0 0
    %446 = vmatpush1.bf16.msra.mxu0 0
    %447 = vmatprep.subr.bf16.mxu0 0
    %448 = vmatpush1.bf16.msra.mxu0 0
    %449 = vmatprep.subr.bf16.mxu0 0
    %450 = vmatpush1.bf16.msra.mxu0 0
    %451 = vmatprep.subr.bf16.mxu0 0
    %452 = vmatpush1.bf16.msra.mxu0 0
    %453 = vmatprep.subr.bf16.mxu0 0
    %454 = vmatpush1.bf16.msra.mxu0 0
    %455 = vmatprep.subr.bf16.mxu0 0
    %456 = vmatpush1.bf16.msra.mxu0 0
    %457 = vmatprep.subr.bf16.mxu0 0
    %458 = vmatpush1.bf16.msra.mxu0 0
    %459 = vmatprep.subr.bf16.mxu0 0
    %460 = vmatpush1.bf16.msra.mxu0 0
    %461 = vmatprep.subr.bf16.mxu0 0
    %462 = vmatpush1.bf16.msra.mxu0 0
    %463 = vmatprep.subr.bf16.mxu0 0
    %464 = vmatpush1.bf16.msra.mxu0 0
    %465 = vmatprep.subr.bf16.mxu0 0
    %466 = vmatpush1.bf16.msra.mxu0 0
    %467 = vmatprep.mubr.bf16.mxu0 0
    %468 = vmatmul.mubr.bf16.gmra.mrb[0].mxu0 %v433
    %v469 = vpop.f32.mrb[0].mxu0
    %v470 = vadd.f32 %v413, %v469
    %v471 = vpop.f32.mrb[0].mxu0
    %v472 = vpop.f32.mrb[0].mxu0
    %v473 = vadd.f32 %v413, %v472
    %v474 = vpop.f32.mrb[0].mxu0
    %475 = vdwg.mxu0
    %v476 = vld [vmem:[%s9] sm:$0xf]
    %v477 = vld [vmem:[%s9 + $0x4] sm:$0xf]
    %v478 = vld [vmem:[%s12] sm:$0xf]
    %v479 = vld [vmem:[%s12 + $0x4] sm:$0xf]
    %v480 = vld [vmem:[%s12 + $0x8] sm:$0xf]
    %v481 = vld [vmem:[%s12 + $0xc] sm:$0xf]
    %v482 = vld [vmem:[%s13] sm:$0x1]
    %v484 = vlaneseq
    %v485 = vshrl.u32 %v484, 7
    %v486 = vsub.s32 0, %v485
    %v487 = vrot.slane %v482, %v486
    %v491 = vunpack.c.l.b16 %v476
    %v492 = vunpack.c.l.b16 %v477
    %v493 = vpack.c.b16 %v492, %v491
    %v498 = vunpack.c.l.b16 %v478
    %v499 = vunpack.c.l.b16 %v479
    %v500 = vunpack.c.l.b16 %v480
    %v501 = vunpack.c.l.b16 %v481
    %v502 = vpack.c.b16 %v499, %v498
    %v503 = vpack.c.b16 %v501, %v500
    %v507 = vsel %vm88, %v493, 0
    %509 = vmatprep.subr.bf16.mxu0 0
    %510 = vmatpush1.bf16.msra.mxu0 %v502
    %511 = vmatprep.subr.bf16.mxu0 0
    %512 = vmatpush1.bf16.msra.mxu0 %v503
    %513 = vmatprep.subr.bf16.mxu0 0
    %514 = vmatpush1.bf16.msra.mxu0 0
    %515 = vmatprep.subr.bf16.mxu0 0
    %516 = vmatpush1.bf16.msra.mxu0 0
    %517 = vmatprep.subr.bf16.mxu0 0
    %518 = vmatpush1.bf16.msra.mxu0 0
    %519 = vmatprep.subr.bf16.mxu0 0
    %520 = vmatpush1.bf16.msra.mxu0 0
    %521 = vmatprep.subr.bf16.mxu0 0
    %522 = vmatpush1.bf16.msra.mxu0 0
    %523 = vmatprep.subr.bf16.mxu0 0
    %524 = vmatpush1.bf16.msra.mxu0 0
    %525 = vmatprep.subr.bf16.mxu0 0
    %526 = vmatpush1.bf16.msra.mxu0 0
    %527 = vmatprep.subr.bf16.mxu0 0
    %528 = vmatpush1.bf16.msra.mxu0 0
    %529 = vmatprep.subr.bf16.mxu0 0
    %530 = vmatpush1.bf16.msra.mxu0 0
    %531 = vmatprep.subr.bf16.mxu0 0
    %532 = vmatpush1.bf16.msra.mxu0 0
    %533 = vmatprep.subr.bf16.mxu0 0
    %534 = vmatpush1.bf16.msra.mxu0 0
    %535 = vmatprep.subr.bf16.mxu0 0
    %536 = vmatpush1.bf16.msra.mxu0 0
    %537 = vmatprep.subr.bf16.mxu0 0
    %538 = vmatpush1.bf16.msra.mxu0 0
    %539 = vmatprep.subr.bf16.mxu0 0
    %540 = vmatpush1.bf16.msra.mxu0 0
    %541 = vmatprep.mubr.bf16.mxu0 0
    %542 = vmatmul.mubr.bf16.gmra.mrb[0].mxu0 %v507
    %v543 = vpop.f32.mrb[0].mxu0
    %v544 = vadd.f32 %v487, %v543
    %v545 = vpop.f32.mrb[0].mxu0
    %v546 = vpop.f32.mrb[0].mxu0
    %v547 = vadd.f32 %v487, %v546
    %v548 = vpop.f32.mrb[0].mxu0
    %549 = vdwg.mxu0
    %v550 = vpack.c.bf16 %v470, %v470
    %v551 = vpack.c.bf16 %v473, %v473
    %v552 = vpack.c.bf16 %v544, %v544
    %v553 = vpack.c.bf16 %v547, %v547
    %v554 = vld [vmem:[%s14] sm:$0xff]
    %v556 = vsel %vm88, %v550, 0
    %v559 = vsel %vm88, %v552, 0
    %561 = vmatprep.subr.bf16.mxu0 0
    %562 = vmatpush1.bf16.xpose.msra.mxu0 %v559
    %563 = vmatprep.subr.bf16.mxu0 0
    %564 = vmatpush1.bf16.xpose.msra.mxu0 0
    %565 = vmatprep.subr.bf16.mxu0 0
    %566 = vmatpush1.bf16.xpose.msra.mxu0 0
    %567 = vmatprep.subr.bf16.mxu0 0
    %568 = vmatpush1.bf16.xpose.msra.mxu0 0
    %569 = vmatprep.subr.bf16.mxu0 0
    %570 = vmatpush1.bf16.xpose.msra.mxu0 0
    %571 = vmatprep.subr.bf16.mxu0 0
    %572 = vmatpush1.bf16.xpose.msra.mxu0 0
    %573 = vmatprep.subr.bf16.mxu0 0
    %574 = vmatpush1.bf16.xpose.msra.mxu0 0
    %575 = vmatprep.subr.bf16.mxu0 0
    %576 = vmatpush1.bf16.xpose.msra.mxu0 0
    %577 = vmatprep.subr.bf16.mxu0 0
    %578 = vmatpush1.bf16.xpose.msra.mxu0 0
    %579 = vmatprep.subr.bf16.mxu0 0
    %580 = vmatpush1.bf16.xpose.msra.mxu0 0
    %581 = vmatprep.subr.bf16.mxu0 0
    %582 = vmatpush1.bf16.xpose.msra.mxu0 0
    %583 = vmatprep.subr.bf16.mxu0 0
    %584 = vmatpush1.bf16.xpose.msra.mxu0 0
    %585 = vmatprep.subr.bf16.mxu0 0
    %586 = vmatpush1.bf16.xpose.msra.mxu0 0
    %587 = vmatprep.subr.bf16.mxu0 0
    %588 = vmatpush1.bf16.xpose.msra.mxu0 0
    %589 = vmatprep.subr.bf16.mxu0 0
    %590 = vmatpush1.bf16.xpose.msra.mxu0 0
    %591 = vmatprep.subr.bf16.mxu0 0
    %592 = vmatpush1.bf16.xpose.msra.mxu0 0
    %593 = vmatprep.mubr.bf16.mxu0 0
    %594 = vmatmul.mubr.bf16.gmra.mrb[0].mxu0 %v556
    %v595 = vpop.f32.mrb[0].mxu0
    %v596 = vadd.f32 %v554, %v595
    %v597 = vpop.f32.mrb[0].mxu0
    %v598 = vpop.f32.mrb[0].mxu0
    %v599 = vpop.f32.mrb[0].mxu0
    %600 = vdwg.mxu0
    %v602 = vsel %vm88, %v551, 0
    %v605 = vsel %vm88, %v553, 0
    %607 = vmatprep.subr.bf16.mxu0 0
    %608 = vmatpush1.bf16.xpose.msra.mxu0 %v605
    %609 = vmatprep.subr.bf16.mxu0 0
    %610 = vmatpush1.bf16.xpose.msra.mxu0 0
    %611 = vmatprep.subr.bf16.mxu0 0
    %612 = vmatpush1.bf16.xpose.msra.mxu0 0
    %613 = vmatprep.subr.bf16.mxu0 0
    %614 = vmatpush1.bf16.xpose.msra.mxu0 0
    %615 = vmatprep.subr.bf16.mxu0 0
    %616 = vmatpush1.bf16.xpose.msra.mxu0 0
    %617 = vmatprep.subr.bf16.mxu0 0
    %618 = vmatpush1.bf16.xpose.msra.mxu0 0
    %619 = vmatprep.subr.bf16.mxu0 0
    %620 = vmatpush1.bf16.xpose.msra.mxu0 0
    %621 = vmatprep.subr.bf16.mxu0 0
    %622 = vmatpush1.bf16.xpose.msra.mxu0 0
    %623 = vmatprep.subr.bf16.mxu0 0
    %624 = vmatpush1.bf16.xpose.msra.mxu0 0
    %625 = vmatprep.subr.bf16.mxu0 0
    %626 = vmatpush1.bf16.xpose.msra.mxu0 0
    %627 = vmatprep.subr.bf16.mxu0 0
    %628 = vmatpush1.bf16.xpose.msra.mxu0 0
    %629 = vmatprep.subr.bf16.mxu0 0
    %630 = vmatpush1.bf16.xpose.msra.mxu0 0
    %631 = vmatprep.subr.bf16.mxu0 0
    %632 = vmatpush1.bf16.xpose.msra.mxu0 0
    %633 = vmatprep.subr.bf16.mxu0 0
    %634 = vmatpush1.bf16.xpose.msra.mxu0 0
    %635 = vmatprep.subr.bf16.mxu0 0
    %636 = vmatpush1.bf16.xpose.msra.mxu0 0
    %637 = vmatprep.subr.bf16.mxu0 0
    %638 = vmatpush1.bf16.xpose.msra.mxu0 0
    %639 = vmatprep.mubr.bf16.mxu0 0
    %640 = vmatmul.mubr.bf16.gmra.mrb[0].mxu0 %v602
    %v641 = vpop.f32.mrb[0].mxu0
    %v642 = vadd.f32 %v554, %v641
    %v643 = vpop.f32.mrb[0].mxu0
    %v644 = vpop.f32.mrb[0].mxu0
    %v645 = vpop.f32.mrb[0].mxu0
    %646 = vdwg.mxu0
    %vm647 = vcmask 64512
    %v648 = vsel %vm647, %v596, -inf
    %649 = vmax.xlane.f32.xlu0 %v648
    %v650 = vpop.xlane.xlu0 %649
    %v651 = vsel %vm647, %v642, -inf
    %652 = vmax.xlane.f32.xlu0 %v651
    %v653 = vpop.xlane.xlu0 %652
    %v654 = vrot.slane %v650, 4
    %v655 = vmax.f32 %v650, %v654
    %v656 = vrot.slane %v655, 2
    %v657 = vmax.f32 %v655, %v656
    %v658 = vrot.slane %v657, 1
    %v659 = vmax.f32 %v657, %v658
    %v660 = vrot.slane %v653, 4
    %v661 = vmax.f32 %v653, %v660
    %v662 = vrot.slane %v661, 2
    %v663 = vmax.f32 %v661, %v662
    %v664 = vrot.slane %v663, 1
    %v665 = vmax.f32 %v663, %v664
    %v666 = vsub.f32 %v596, %v659
    %v667 = vsub.f32 %v642, %v665
    %v668 = vmul.f32 %v666, 1.442695
    %v669 = vpow.pop %v668
    %v670 = vmul.f32 %v667, 1.442695
    %v671 = vpow.pop %v670
    %v672 = vsel %vm647, %v669, 0.0
    %673 = vadd.xlane.f32.xlu0 %v672
    %v674 = vpop.xlane.xlu0 %673
    %v675 = vsel %vm647, %v671, 0.0
    %676 = vadd.xlane.f32.xlu0 %v675
    %v677 = vpop.xlane.xlu0 %676
    %v678 = vrot.slane %v674, 4
    %v679 = vadd.f32 %v674, %v678
    %v680 = vrot.slane %v679, 2
    %v681 = vadd.f32 %v679, %v680
    %v682 = vrot.slane %v681, 1
    %v683 = vadd.f32 %v681, %v682
    %v684 = vrot.slane %v677, 4
    %v685 = vadd.f32 %v677, %v684
    %v686 = vrot.slane %v685, 2
    %v687 = vadd.f32 %v685, %v686
    %v688 = vrot.slane %v687, 1
    %v689 = vadd.f32 %v687, %v688
    %v690 = vlog2.pop %v683
    %v691 = vmul.f32 %v690, 0.6931472
    %v692 = vlog2.pop %v689
    %v693 = vmul.f32 %v692, 0.6931472
    %v694 = vsub.f32 %v666, %v691
    %v695 = vsub.f32 %v667, %v693
    %696 = vst.msk [vmem:[%s16] sm:$0xff] %vm647, %v694
    %697 = vst.msk [vmem:[%s16 + $0x8] sm:$0xff] %vm647, %v695
    %v698 = vsub.f32 0.0, %v691
    %v699 = vsub.f32 0.0, %v693
    %v701 = vrot.slane %v361, 1
    %v704 = vadd.f32 %v698, %v361
    %v705 = vadd.f32 %v699, %v701
    %v708 = vrot.slane %v705, 7
    %v709 = vsel %vm282, %v708, %v704
    %711 = vst.msk [vmem:[%s19] sm:$0x3] %vm362, %v709
    %v712 = vlaneseq
    %v713 = vshrl.u32 %v712, 7
    %v714 = vmul.u32 %v713, 4
    %v715 = vadd.s32 %v714, %v273
    %vm716 = vcmp.eq.f32.partialorder %v596, %v659
    %vm717 = vcmp.eq.f32.partialorder %v642, %v665
    %v718 = vsel %vm716, %v715, 1073741824
    %v719 = vsel %vm717, %v715, 1073741824
    %v720 = vsel %vm647, %v718, 2147483647
    %v721 = vand.u32 %v720, 65535
    %v722 = vshra.s32 %v720, 16
    %v723 = vcvt.s32.f32 %v721
    %v724 = vcvt.s32.f32 %v722
    %725 = vmin.xlane.f32.xlu0 %v724
    %v726 = vpop.xlane.xlu0 %725
    %vm727 = vcmp.eq.f32.partialorder %v724, %v726
    %v728 = vsel %vm727, %v723, inf
    %729 = vmin.xlane.f32.xlu0 %v728
    %v730 = vpop.xlane.xlu0 %729
    %v731 = vcvt.f32.s32 %v730
    %v732 = vcvt.f32.s32 %v726
    %v733 = vshll.u32 %v732, 16
    %v734 = vadd.s32 %v733, %v731
    %v735 = vsel %vm647, %v719, 2147483647
    %v736 = vand.u32 %v735, 65535
    %v737 = vshra.s32 %v735, 16
    %v738 = vcvt.s32.f32 %v736
    %v739 = vcvt.s32.f32 %v737
    %740 = vmin.xlane.f32.xlu0 %v739
    %v741 = vpop.xlane.xlu0 %740
    %vm742 = vcmp.eq.f32.partialorder %v739, %v741
    %v743 = vsel %vm742, %v738, inf
    %744 = vmin.xlane.f32.xlu0 %v743
    %v745 = vpop.xlane.xlu0 %744
    %v746 = vcvt.f32.s32 %v745
    %v747 = vcvt.f32.s32 %v741
    %v748 = vshll.u32 %v747, 16
    %v749 = vadd.s32 %v748, %v746
    %v750 = vrot.slane %v734, 4
    %vm751 = vcmp.lt.s32.totalorder %v734, %v750
    %v752 = vsel %vm751, %v734, %v750
    %v753 = vrot.slane %v752, 2
    %vm754 = vcmp.lt.s32.totalorder %v752, %v753
    %v755 = vsel %vm754, %v752, %v753
    %v756 = vrot.slane %v755, 1
    %vm757 = vcmp.lt.s32.totalorder %v755, %v756
    %v758 = vsel %vm757, %v755, %v756
    %v759 = vrot.slane %v749, 4
    %vm760 = vcmp.lt.s32.totalorder %v749, %v759
    %v761 = vsel %vm760, %v749, %v759
    %v762 = vrot.slane %v761, 2
    %vm763 = vcmp.lt.s32.totalorder %v761, %v762
    %v764 = vsel %vm763, %v761, %v762
    %v765 = vrot.slane %v764, 1
    %vm766 = vcmp.lt.s32.totalorder %v764, %v765
    %v767 = vsel %vm766, %v764, %v765
    %v768 = vsel %vm282, %v767, %v758
    %769 = vst.msk [vmem:[%s20] sm:$0x3] %vm362, %v768
    // Predicated region
    $region62: #{_anch_device.1} parent=1 // pred_check
      _
    $region63: #{_anch_device.1} parent=1 // pred_check_branch
      %771 = sbr.rel (0) target = $region65
    $region64: #{_anch_device.1} parent=1 // pred_region
      %s773 = ssub.s32 32, 32
      %774 = vsyncadd [#allocation3], %s773
      %s776 = sshll.u32 [#allocation2], 4
      %s777 = int_to_ptr.vmem [resolvable:$true] %s776
      %779 = dma.vmem_to_hbm [thread:$0]  %s777, 32, %s15, [#allocation3]
    $region65: #{_anch_device.1} parent=1 // pred_fallthru
      _
    // Predicated region
    $region66: #{_anch_device.1} parent=1 // pred_check
      _
    $region67: #{_anch_device.1} parent=1 // pred_check_branch
      %781 = sbr.rel (0) target = $region69
    $region68: #{_anch_device.1} parent=1 // pred_region
      _
    $region69: #{_anch_device.1} parent=1 // pred_fallthru
      _
    // Predicated region
    $region70: #{_anch_device.1} parent=1 // pred_check
      _
    $region71: #{_anch_device.1} parent=1 // pred_check_branch
      %783 = sbr.rel (0) target = $region73
    $region72: #{_anch_device.1} parent=1 // pred_region
      _
    $region73: #{_anch_device.1} parent=1 // pred_fallthru
      _
    // Predicated region
    $region74: #{_anch_device.1} parent=1 // pred_check
      _
    $region75: #{_anch_device.1} parent=1 // pred_check_branch
      %785 = sbr.rel (0) target = $region77
    $region76: #{_anch_device.1} parent=1 // pred_region
      _
    $region77: #{_anch_device.1} parent=1 // pred_fallthru
      _
    // Predicated region
    $region78: #{_anch_device.1} parent=1 // pred_check
      _
    $region79: #{_anch_device.1} parent=1 // pred_check_branch
      %787 = sbr.rel (0) target = $region81
    $region80: #{_anch_device.1} parent=1 // pred_region
      _
    $region81: #{_anch_device.1} parent=1 // pred_fallthru
      _
    // Predicated region
    $region82: #{_anch_device.1} parent=1 // pred_check
      _
    $region83: #{_anch_device.1} parent=1 // pred_check_branch
      %789 = sbr.rel (0) target = $region85
    $region84: #{_anch_device.1} parent=1 // pred_region
      _
    $region85: #{_anch_device.1} parent=1 // pred_fallthru
      _
    // Predicated region
    $region86: #{_anch_device.1} parent=1 // pred_check
      _
    $region87: #{_anch_device.1} parent=1 // pred_check_branch
      %791 = sbr.rel (0) target = $region89
    $region88: #{_anch_device.1} parent=1 // pred_region
      %792 = dma.done [#allocation3], 32
    $region89: #{_anch_device.1} parent=1 // pred_fallthru
      _
    // Predicated region
    $region90: #{_anch_device.1} parent=1 // pred_check
      _
    $region91: #{_anch_device.1} parent=1 // pred_check_branch
      %794 = sbr.rel (0) target = $region93
    $region92: #{_anch_device.1} parent=1 // pred_region
      _
    $region93: #{_anch_device.1} parent=1 // pred_fallthru
      _
    // Predicated region
    $region94: #{_anch_device.1} parent=1 // pred_check
      _
    $region95: #{_anch_device.1} parent=1 // pred_check_branch
      %796 = sbr.rel (0) target = $region97
    $region96: #{_anch_device.1} parent=1 // pred_region
      _
    $region97: #{_anch_device.1} parent=1 // pred_fallthru
      _
    // Predicated region
    $region98: #{_anch_device.1} parent=1 // pred_check
      _
    $region99: #{_anch_device.1} parent=1 // pred_check_branch
      %798 = sbr.rel (0) target = $region101
    $region100: #{_anch_device.1} parent=1 // pred_region
      _
    $region101: #{_anch_device.1} parent=1 // pred_fallthru
      _
    // Predicated region
    $region102: #{_anch_device.1} parent=1 // pred_check
      _
    $region103: #{_anch_device.1} parent=1 // pred_check_branch
      %800 = sbr.rel (0) target = $region105
    $region104: #{_anch_device.1} parent=1 // pred_region
      _
    $region105: #{_anch_device.1} parent=1 // pred_fallthru
      _
    // Predicated region
    $region106: #{_anch_device.1} parent=1 // pred_check
      _
    $region107: #{_anch_device.1} parent=1 // pred_check_branch
      %802 = sbr.rel (0) target = $region109
    $region108: #{_anch_device.1} parent=1 // pred_region
      _
    $region109: #{_anch_device.1} parent=1 // pred_fallthru
      _
    %803 = vsyncpa [#allocation3], 1

</llo_original>
